<compile_context>
chip_gen: v7x
topology: tpu7x:2x2x1
jax: 0.10.0
libtpu: 0.0.40
codegen_flags: <defaults>
</compile_context>

<pallas_src>
import functools

import jax
import jax.numpy as jnp
from jax import lax
from jax.experimental import pallas as pl
from jax.experimental.pallas import tpu as pltpu

EPS = 1e-5


def _resnet_block_kernel(x_ref, w1_ref, w2_ref, pp_ref, out_ref, pad_ref,
                         *, n, h, w, c):
    nh = n * h
    wc = w * c
    inv_m = 1.0 / float(n * h * w)

    # Packed per-channel params, pre-tiled over W in the wrapper -> each row is (1, W*C).
    pp = pp_ref[...]
    g1, be1 = pp[0:1, :], pp[1:2, :]
    g2, be2 = pp[2:3, :], pp[3:4, :]
    bs = pp[4:5, :]

    # Zero the one-row halo of the shared padded scratch once; both convs reuse it.
    zrow = jnp.zeros((n, 1, wc), pad_ref.dtype)
    pad_ref[:, 0:1, :] = zrow
    pad_ref[:, h + 1:h + 2, :] = zrow

    def conv3x3(center_f32, center_bf16, w_ref):
        # Stage interior rows; the h-1 / h+1 row windows come from the halo'd scratch, the
        # centre row reuses the resident activation.  The +/-1 W taps (and the W border
        # zero-padding) are folded into the block-tridiagonal RHS, so the whole 3x3 conv is
        # ONE (nh, 3*wc) x (3*wc, ncols) bf16 MXU dot with f32 accumulation.
        pad_ref[:, 1:h + 1, :] = center_f32.reshape(n, h, wc)
        up = pad_ref[:, 0:h, :].reshape(nh, wc).astype(jnp.bfloat16)
        dn = pad_ref[:, 2:h + 2, :].reshape(nh, wc).astype(jnp.bfloat16)
        cols = jnp.concatenate([up, center_bf16, dn], axis=1)          # (nh, 3*wc) bf16
        return jnp.dot(cols, w_ref[...], preferred_element_type=jnp.float32)

    def bn_relu(acc, g_t, b_t, relu):
        # Batch stats per channel (lanes are (w, c)): reduce rows, then all-reduce the W
        # lane groups with log2(W) XLU rolls; fold BN into one scale/shift pass.
        s = jnp.sum(acc, axis=0, keepdims=True)
        ss = jnp.sum(acc * acc, axis=0, keepdims=True)
        st = jnp.concatenate([s, ss], axis=0)                          # (2, wc) f32
        span = c
        while span < wc:
            st = st + pltpu.roll(st, span, axis=1)
            span *= 2
        mu = st[0:1, :] * inv_m
        var = st[1:2, :] * inv_m - mu * mu
        a = lax.rsqrt(var + EPS) * g_t                                 # folded BN scale
        b = b_t - mu * a                                               # folded BN shift
        y = acc * a + b
        return jnp.maximum(y, 0.0) if relu else y

    x_lm = x_ref[...]                                                  # (nh, wc) bf16

    # conv1 (+ fused 1x1 shortcut columns) -> BN1 -> ReLU.  Conv biases omitted: a
    # per-channel bias is exactly cancelled by the following batch-stats BatchNorm.
    acc = conv3x3(x_lm.astype(jnp.float32), x_lm, w1_ref)              # (nh, 2*wc) f32
    y1 = bn_relu(acc[:, :wc], g1, be1, relu=True)
    sc = acc[:, wc:] + bs                                              # shortcut (bias kept)

    # conv2 -> BN2 (no ReLU inside the block)
    y2 = bn_relu(conv3x3(y1, y1.astype(jnp.bfloat16), w2_ref), g2, be2, relu=False)

    # residual add + final ReLU; lane-dense (nh, wc) store
    out_ref[...] = jnp.maximum(y2 + sc, 0.0).astype(out_ref.dtype)


def _lane_merged_conv3x3_weight(w_hwio, width):
    # (3, 3, Ci, Co) HWIO -> (3*width*Ci, width*Co): for each dh a block-TRIDIAGONAL
    # (over w) matrix so that the +/-1 W taps (and the W zero-padding at the borders)
    # are absorbed into the matmul RHS.
    kh, kw, ci, co = w_hwio.shape
    blocks = []
    for dh in range(kh):
        blk = jnp.zeros((width, ci, width, co), w_hwio.dtype)
        for dw in range(kw):
            # E[w_in, w_out] = 1  iff  w_in == w_out + (dw - 1)
            eye = jnp.eye(width, k=1 - dw, dtype=w_hwio.dtype)
            blk = blk + jnp.einsum("vw,ic->viwc", eye, w_hwio[dh, dw])
        blocks.append(blk.reshape(width * ci, width * co))
    return jnp.concatenate(blocks, axis=0)


def _lane_merged_1x1_weight(ws, width):
    # (Ci, Co) -> (width*Ci, width*Co) block-diagonal over w.
    eye = jnp.eye(width, dtype=ws.dtype)
    return jnp.einsum("vw,ic->viwc", eye, ws).reshape(width * ws.shape[0],
                                                      width * ws.shape[1])


def _full_spec(shape):
    zeros = (0,) * len(shape)
    return pl.BlockSpec(shape, lambda i, z=zeros: z)


@jax.jit
def resnet_identity_block_v2(x_nchw, params):
    """Forward pass of ResnetIdentityBlockV2. Input/output are NCHW (PyTorch convention)."""
    N, Cin, H, W = x_nchw.shape
    Cout = params["w1"].shape[-1]
    assert Cin == Cout, "lane-merged layout + shared scratch assume Cin == Cout here"
    assert (W & (W - 1)) == 0, "W must be a power of two for the lane all-reduce"
    WC = W * Cout

    # NCHW -> lane-merged (N*H, W*Cin) bf16 (MXU operand).  The whole wrapper is jitted so
    # transpose+reshape+cast fuse into one HBM pass (NCHW public interface kept).
    x_lm = jnp.transpose(x_nchw, (0, 2, 3, 1)).reshape(N * H, W * Cin).astype(jnp.bfloat16)

    # conv1 RHS (block-tridiagonal over w) with the 1x1 shortcut fused as extra columns
    # (shortcut weight sits in the dh=1 rows, block-diagonal over w).
    w1_big = _lane_merged_conv3x3_weight(params["w1"], W)              # (3*W*Cin, W*Cout)
    sc_big = jnp.zeros_like(w1_big).at[W * Cin:2 * W * Cin, :].set(
        _lane_merged_1x1_weight(params["ws"], W))
    w1_full = jnp.concatenate([w1_big, sc_big], axis=1).astype(jnp.bfloat16)  # (384, 2*WC)
    w2_full = _lane_merged_conv3x3_weight(params["w2"], W).astype(jnp.bfloat16)  # (384, WC)

    # Pack the five per-channel vectors into one (5, W*Cout) f32 input, pre-tiled over w.
    def tile_c(p):
        return jnp.tile(p.reshape(1, Cout), (1, W)).reshape(WC)

    pp = jnp.stack([tile_c(params["g1"]), tile_c(params["be1"]),
                    tile_c(params["g2"]), tile_c(params["be2"]),
                    tile_c(params["bs"])])                              # (5, WC)

    # b1 / b2 intentionally NOT passed: conv bias followed by batch-stats BN is a no-op.
    args = (x_lm, w1_full, w2_full, pp)
    kernel = functools.partial(_resnet_block_kernel, n=N, h=H, w=W, c=Cout)

    out_lm = pl.pallas_call(
        kernel,
        out_shape=jax.ShapeDtypeStruct((N * H, WC), x_nchw.dtype),
        grid=(1,),
        in_specs=[_full_spec(a.shape) for a in args],
        out_specs=_full_spec((N * H, WC)),
        scratch_shapes=[pltpu.VMEM((N, H + 2, WC), jnp.float32)],
        compiler_params=pltpu.CompilerParams(
            dimension_semantics=("arbitrary",),
            vmem_limit_bytes=32 * 1024 * 1024),
    )(*args)

    return jnp.transpose(out_lm.reshape(N, H, W, Cout), (0, 3, 1, 2))   # back to NCHW


# ------------------------- pure-JAX reference (for verification) -------------------------
def _reference_forward(x, p):
    def conv(x, w_hwio, b, pad):
        w_oihw = jnp.transpose(w_hwio, (3, 2, 0, 1))
        y = lax.conv_general_dilated(x, w_oihw, (1, 1), [(pad, pad), (pad, pad)],
                                     dimension_numbers=("NCHW", "OIHW", "NCHW"))
        return y + b.reshape(1, -1, 1, 1)

    def bn(x, g, be):
        mu = jnp.mean(x, axis=(0, 2, 3), keepdims=True)
        var = jnp.mean((x - mu) ** 2, axis=(0, 2, 3), keepdims=True)
        return (x - mu) * lax.rsqrt(var + EPS) * g.reshape(1, -1, 1, 1) + be.reshape(1, -1, 1, 1)

    sc = conv(x, p["ws"].reshape(1, 1, *p["ws"].shape), p["bs"], 0)
    y = conv(x, p["w1"], p["b1"], 1)
    y = jnp.maximum(bn(y, p["g1"], p["be1"]), 0.0)
    y = conv(y, p["w2"], p["b2"], 1)
    y = bn(y, p["g2"], p["be2"])
    return jnp.maximum(sc + y, 0.0)


if __name__ == "__main__":
    key = jax.random.PRNGKey(0)
    N, Cin, H, W, Cout = 2, 8, 16, 16, 8
    keys = jax.random.split(key, 7)

    x = jax.random.normal(keys[0], (N, Cin, H, W), jnp.float32)

    def uinit(k, shape, fan_in):
        bound = 1.0 / (fan_in ** 0.5)
        return jax.random.uniform(k, shape, jnp.float32, -bound, bound)

    # Deterministic parameter init (PyTorch-like fan-in uniform; BN gamma=1, beta=0).
    params = dict(
        w1=uinit(keys[1], (3, 3, Cin, Cout), 3 * 3 * Cin),    # HWIO
        b1=uinit(keys[2], (1, Cout), 3 * 3 * Cin),            # only used by the reference
        g1=jnp.ones((1, Cout), jnp.float32),
        be1=jnp.zeros((1, Cout), jnp.float32),
        w2=uinit(keys[3], (3, 3, Cout, Cout), 3 * 3 * Cout),  # HWIO
        b2=uinit(keys[4], (1, Cout), 3 * 3 * Cout),           # only used by the reference
        g2=jnp.ones((1, Cout), jnp.float32),
        be2=jnp.zeros((1, Cout), jnp.float32),
        ws=uinit(keys[5], (Cin, Cout), Cin),                  # 1x1 conv as (Cin, Cout)
        bs=uinit(keys[6], (1, Cout), Cin),
    )

    out = jax.block_until_ready(resnet_identity_block_v2(x, params))
    ref = jax.block_until_ready(_reference_forward(x, params))

    assert out.shape == (N, Cout, H, W), out.shape
    # bf16 MXU operands (fp32 accumulation) vs. a pure-fp32 reference -> looser tolerance.
    if not bool(jnp.allclose(out, ref, rtol=5e-2, atol=5e-2)):
        raise AssertionError("Pallas kernel does not match JAX reference")
    print("KERNEL_OK")
</pallas_src>

<mosaic_0001>
module attributes {stable_mosaic.version = 11 : i64} {
  func.func @_resnet_block_kernel(%arg0: i32, %arg1: memref<32x128xbf16, #tpu.memory_space<vmem>>, %arg2: memref<384x256xbf16, #tpu.memory_space<vmem>>, %arg3: memref<384x128xbf16, #tpu.memory_space<vmem>>, %arg4: memref<5x128xf32, #tpu.memory_space<vmem>>, %arg5: memref<32x128xf32, #tpu.memory_space<vmem>>, %arg6: memref<2x18x128xf32, #tpu.memory_space<vmem>>) attributes {dimension_semantics = [#tpu.dimension_semantics<arbitrary>], iteration_bounds = array<i64: 1>, scalar_prefetch = 0 : i64, scratch_operands = 1 : i64, tpu.core_type = #tpu.core_type<tc>, window_params = [{pipeline_mode = #tpu.pipeline_mode<synchronous>, transform_indices = @transform_0, window_bounds = array<i64: 32, 128>}, {pipeline_mode = #tpu.pipeline_mode<synchronous>, transform_indices = @transform_1, window_bounds = array<i64: 384, 256>}, {pipeline_mode = #tpu.pipeline_mode<synchronous>, transform_indices = @transform_2, window_bounds = array<i64: 384, 128>}, {pipeline_mode = #tpu.pipeline_mode<synchronous>, transform_indices = @transform_3, window_bounds = array<i64: 5, 128>}, {pipeline_mode = #tpu.pipeline_mode<synchronous>, transform_indices = @transform_4, window_bounds = array<i64: 32, 128>}]} {
    %c0 = arith.constant 0 : index
    %c0_0 = arith.constant 0 : index
    %0 = vector.load %arg4[%c0, %c0_0] : memref<5x128xf32, #tpu.memory_space<vmem>>, vector<5x128xf32>
    %1 = vector.extract_strided_slice %0 {offsets = [0, 0], sizes = [1, 128], strides = [1, 1]} : vector<5x128xf32> to vector<1x128xf32>
    %2 = vector.extract_strided_slice %0 {offsets = [1, 0], sizes = [1, 128], strides = [1, 1]} : vector<5x128xf32> to vector<1x128xf32>
    %3 = vector.extract_strided_slice %0 {offsets = [2, 0], sizes = [1, 128], strides = [1, 1]} : vector<5x128xf32> to vector<1x128xf32>
    %4 = vector.extract_strided_slice %0 {offsets = [3, 0], sizes = [1, 128], strides = [1, 1]} : vector<5x128xf32> to vector<1x128xf32>
    %5 = vector.extract_strided_slice %0 {offsets = [4, 0], sizes = [1, 128], strides = [1, 1]} : vector<5x128xf32> to vector<1x128xf32>
    %cst = arith.constant 0.000000e+00 : f32
    %6 = vector.broadcast %cst : f32 to vector<2x1x128xf32>
    %c0_1 = arith.constant 0 : index
    %c0_2 = arith.constant 0 : index
    %c0_3 = arith.constant 0 : index
    %7 = vector.load %arg6[%c0_1, %c0_2, %c0_3] : memref<2x18x128xf32, #tpu.memory_space<vmem>>, vector<2x1x128xf32>
    tpu.vector_store %arg6[%c0_1, %c0_2, %c0_3], %6 {strides = array<i32>} : memref<2x18x128xf32, #tpu.memory_space<vmem>>, vector<2x1x128xf32>,
    %c0_4 = arith.constant 0 : index
    %c17 = arith.constant 17 : index
    %c0_5 = arith.constant 0 : index
    %8 = vector.load %arg6[%c0_4, %c17, %c0_5] : memref<2x18x128xf32, #tpu.memory_space<vmem>>, vector<2x1x128xf32>
    tpu.vector_store %arg6[%c0_4, %c17, %c0_5], %6 {strides = array<i32>} : memref<2x18x128xf32, #tpu.memory_space<vmem>>, vector<2x1x128xf32>,
    %c0_6 = arith.constant 0 : index
    %c0_7 = arith.constant 0 : index
    %9 = vector.load %arg1[%c0_6, %c0_7] : memref<32x128xbf16, #tpu.memory_space<vmem>>, vector<32x128xbf16>
    %10 = arith.extf %9 : vector<32x128xbf16> to vector<32x128xf32>
    %11 = vector.shape_cast %10 : vector<32x128xf32> to vector<2x16x128xf32>
    %c0_8 = arith.constant 0 : index
    %c1 = arith.constant 1 : index
    %c0_9 = arith.constant 0 : index
    %12 = vector.load %arg6[%c0_8, %c1, %c0_9] : memref<2x18x128xf32, #tpu.memory_space<vmem>>, vector<2x16x128xf32>
    tpu.vector_store %arg6[%c0_8, %c1, %c0_9], %11 {strides = array<i32>} : memref<2x18x128xf32, #tpu.memory_space<vmem>>, vector<2x16x128xf32>,
    %c0_10 = arith.constant 0 : index
    %c0_11 = arith.constant 0 : index
    %c0_12 = arith.constant 0 : index
    %13 = vector.load %arg6[%c0_10, %c0_11, %c0_12] : memref<2x18x128xf32, #tpu.memory_space<vmem>>, vector<2x16x128xf32>
    %14 = vector.shape_cast %13 : vector<2x16x128xf32> to vector<32x128xf32>
    %15 = arith.truncf %14 : vector<32x128xf32> to vector<32x128xbf16>
    %c0_13 = arith.constant 0 : index
    %c2 = arith.constant 2 : index
    %c0_14 = arith.constant 0 : index
    %16 = vector.load %arg6[%c0_13, %c2, %c0_14] : memref<2x18x128xf32, #tpu.memory_space<vmem>>, vector<2x16x128xf32>
    %17 = vector.shape_cast %16 : vector<2x16x128xf32> to vector<32x128xf32>
    %18 = arith.truncf %17 : vector<32x128xf32> to vector<32x128xbf16>
    %19 = tpu.concatenate %15, %9, %18 in 1 : vector<32x128xbf16>, vector<32x128xbf16>, vector<32x128xbf16> -> vector<32x384xbf16>
    %c0_15 = arith.constant 0 : index
    %c0_16 = arith.constant 0 : index
    %20 = vector.load %arg2[%c0_15, %c0_16] : memref<384x256xbf16, #tpu.memory_space<vmem>>, vector<384x256xbf16>
    %cst_17 = arith.constant dense<0.000000e+00> : vector<32x256xf32>
    %21 = tpu.matmul %19, %20, %cst_17 {dimension_numbers = #tpu.dot_dimension_numbers<[1], [0], [0], [1], [0, 0, 1, 1], [], []>} : vector<32x384xbf16>, vector<384x256xbf16>, vector<32x256xf32> -> vector<32x256xf32>
    %22 = vector.extract_strided_slice %21 {offsets = [0, 0], sizes = [32, 128], strides = [1, 1]} : vector<32x256xf32> to vector<32x128xf32>
    %cst_18 = arith.constant dense<0.000000e+00> : vector<128xf32>
    %23 = vector.multi_reduction <add>, %22, %cst_18 [0] : vector<32x128xf32> to vector<128xf32>
    %24 = vector.shape_cast %23 : vector<128xf32> to vector<1x128xf32>
    %25 = arith.mulf %22, %22 : vector<32x128xf32>
    %cst_19 = arith.constant dense<0.000000e+00> : vector<128xf32>
    %26 = vector.multi_reduction <add>, %25, %cst_19 [0] : vector<32x128xf32> to vector<128xf32>
    %27 = vector.shape_cast %26 : vector<128xf32> to vector<1x128xf32>
    %28 = tpu.concatenate %24, %27 in 0 : vector<1x128xf32>, vector<1x128xf32> -> vector<2x128xf32>
    %c8_i32 = arith.constant 8 : i32
    %29 = tpu.dynamic_rotate %28 by %c8_i32 dim 1 : vector<2x128xf32>, i32 -> vector<2x128xf32>
    %30 = arith.addf %28, %29 : vector<2x128xf32>
    %c16_i32 = arith.constant 16 : i32
    %31 = tpu.dynamic_rotate %30 by %c16_i32 dim 1 : vector<2x128xf32>, i32 -> vector<2x128xf32>
    %32 = arith.addf %30, %31 : vector<2x128xf32>
    %c32_i32 = arith.constant 32 : i32
    %33 = tpu.dynamic_rotate %32 by %c32_i32 dim 1 : vector<2x128xf32>, i32 -> vector<2x128xf32>
    %34 = arith.addf %32, %33 : vector<2x128xf32>
    %c64_i32 = arith.constant 64 : i32
    %35 = tpu.dynamic_rotate %34 by %c64_i32 dim 1 : vector<2x128xf32>, i32 -> vector<2x128xf32>
    %36 = arith.addf %34, %35 : vector<2x128xf32>
    %37 = vector.extract_strided_slice %36 {offsets = [0, 0], sizes = [1, 128], strides = [1, 1]} : vector<2x128xf32> to vector<1x128xf32>
    %cst_20 = arith.constant 0.001953125 : f32
    %38 = vector.broadcast %cst_20 : f32 to vector<1x128xf32>
    %39 = arith.mulf %37, %38 : vector<1x128xf32>
    %40 = vector.extract_strided_slice %36 {offsets = [1, 0], sizes = [1, 128], strides = [1, 1]} : vector<2x128xf32> to vector<1x128xf32>
    %cst_21 = arith.constant 0.001953125 : f32
    %41 = vector.broadcast %cst_21 : f32 to vector<1x128xf32>
    %42 = arith.mulf %40, %41 : vector<1x128xf32>
    %43 = arith.mulf %39, %39 : vector<1x128xf32>
    %44 = arith.subf %42, %43 : vector<1x128xf32>
    %cst_22 = arith.constant 9.99999974E-6 : f32
    %45 = vector.broadcast %cst_22 : f32 to vector<1x128xf32>
    %46 = arith.addf %44, %45 : vector<1x128xf32>
    %47 = math.rsqrt %46 : vector<1x128xf32>
    %48 = arith.mulf %47, %1 : vector<1x128xf32>
    %49 = arith.mulf %39, %48 : vector<1x128xf32>
    %50 = arith.subf %2, %49 : vector<1x128xf32>
    %51 = vector.broadcast %48 : vector<1x128xf32> to vector<32x128xf32>
    %52 = arith.mulf %22, %51 : vector<32x128xf32>
    %53 = vector.broadcast %50 : vector<1x128xf32> to vector<32x128xf32>
    %54 = arith.addf %52, %53 : vector<32x128xf32>
    %cst_23 = arith.constant 0.000000e+00 : f32
    %55 = vector.broadcast %cst_23 : f32 to vector<32x128xf32>
    %56 = arith.maximumf %54, %55 : vector<32x128xf32>
    %57 = vector.extract_strided_slice %21 {offsets = [0, 128], sizes = [32, 128], strides = [1, 1]} : vector<32x256xf32> to vector<32x128xf32>
    %58 = vector.broadcast %5 : vector<1x128xf32> to vector<32x128xf32>
    %59 = arith.addf %57, %58 : vector<32x128xf32>
    %60 = arith.truncf %56 : vector<32x128xf32> to vector<32x128xbf16>
    %61 = vector.shape_cast %56 : vector<32x128xf32> to vector<2x16x128xf32>
    %c0_24 = arith.constant 0 : index
    %c1_25 = arith.constant 1 : index
    %c0_26 = arith.constant 0 : index
    %62 = vector.load %arg6[%c0_24, %c1_25, %c0_26] : memref<2x18x128xf32, #tpu.memory_space<vmem>>, vector<2x16x128xf32>
    tpu.vector_store %arg6[%c0_24, %c1_25, %c0_26], %61 {strides = array<i32>} : memref<2x18x128xf32, #tpu.memory_space<vmem>>, vector<2x16x128xf32>,
    %c0_27 = arith.constant 0 : index
    %c0_28 = arith.constant 0 : index
    %c0_29 = arith.constant 0 : index
    %63 = vector.load %arg6[%c0_27, %c0_28, %c0_29] : memref<2x18x128xf32, #tpu.memory_space<vmem>>, vector<2x16x128xf32>
    %64 = vector.shape_cast %63 : vector<2x16x128xf32> to vector<32x128xf32>
    %65 = arith.truncf %64 : vector<32x128xf32> to vector<32x128xbf16>
    %c0_30 = arith.constant 0 : index
    %c2_31 = arith.constant 2 : index
    %c0_32 = arith.constant 0 : index
    %66 = vector.load %arg6[%c0_30, %c2_31, %c0_32] : memref<2x18x128xf32, #tpu.memory_space<vmem>>, vector<2x16x128xf32>
    %67 = vector.shape_cast %66 : vector<2x16x128xf32> to vector<32x128xf32>
    %68 = arith.truncf %67 : vector<32x128xf32> to vector<32x128xbf16>
    %69 = tpu.concatenate %65, %60, %68 in 1 : vector<32x128xbf16>, vector<32x128xbf16>, vector<32x128xbf16> -> vector<32x384xbf16>
    %c0_33 = arith.constant 0 : index
    %c0_34 = arith.constant 0 : index
    %70 = vector.load %arg3[%c0_33, %c0_34] : memref<384x128xbf16, #tpu.memory_space<vmem>>, vector<384x128xbf16>
    %cst_35 = arith.constant dense<0.000000e+00> : vector<32x128xf32>
    %71 = tpu.matmul %69, %70, %cst_35 {dimension_numbers = #tpu.dot_dimension_numbers<[1], [0], [0], [1], [0, 0, 1, 1], [], []>} : vector<32x384xbf16>, vector<384x128xbf16>, vector<32x128xf32> -> vector<32x128xf32>
    %cst_36 = arith.constant dense<0.000000e+00> : vector<128xf32>
    %72 = vector.multi_reduction <add>, %71, %cst_36 [0] : vector<32x128xf32> to vector<128xf32>
    %73 = vector.shape_cast %72 : vector<128xf32> to vector<1x128xf32>
    %74 = arith.mulf %71, %71 : vector<32x128xf32>
    %cst_37 = arith.constant dense<0.000000e+00> : vector<128xf32>
    %75 = vector.multi_reduction <add>, %74, %cst_37 [0] : vector<32x128xf32> to vector<128xf32>
    %76 = vector.shape_cast %75 : vector<128xf32> to vector<1x128xf32>
    %77 = tpu.concatenate %73, %76 in 0 : vector<1x128xf32>, vector<1x128xf32> -> vector<2x128xf32>
    %c8_i32_38 = arith.constant 8 : i32
    %78 = tpu.dynamic_rotate %77 by %c8_i32_38 dim 1 : vector<2x128xf32>, i32 -> vector<2x128xf32>
    %79 = arith.addf %77, %78 : vector<2x128xf32>
    %c16_i32_39 = arith.constant 16 : i32
    %80 = tpu.dynamic_rotate %79 by %c16_i32_39 dim 1 : vector<2x128xf32>, i32 -> vector<2x128xf32>
    %81 = arith.addf %79, %80 : vector<2x128xf32>
    %c32_i32_40 = arith.constant 32 : i32
    %82 = tpu.dynamic_rotate %81 by %c32_i32_40 dim 1 : vector<2x128xf32>, i32 -> vector<2x128xf32>
    %83 = arith.addf %81, %82 : vector<2x128xf32>
    %c64_i32_41 = arith.constant 64 : i32
    %84 = tpu.dynamic_rotate %83 by %c64_i32_41 dim 1 : vector<2x128xf32>, i32 -> vector<2x128xf32>
    %85 = arith.addf %83, %84 : vector<2x128xf32>
    %86 = vector.extract_strided_slice %85 {offsets = [0, 0], sizes = [1, 128], strides = [1, 1]} : vector<2x128xf32> to vector<1x128xf32>
    %cst_42 = arith.constant 0.001953125 : f32
    %87 = vector.broadcast %cst_42 : f32 to vector<1x128xf32>
    %88 = arith.mulf %86, %87 : vector<1x128xf32>
    %89 = vector.extract_strided_slice %85 {offsets = [1, 0], sizes = [1, 128], strides = [1, 1]} : vector<2x128xf32> to vector<1x128xf32>
    %cst_43 = arith.constant 0.001953125 : f32
    %90 = vector.broadcast %cst_43 : f32 to vector<1x128xf32>
    %91 = arith.mulf %89, %90 : vector<1x128xf32>
    %92 = arith.mulf %88, %88 : vector<1x128xf32>
    %93 = arith.subf %91, %92 : vector<1x128xf32>
    %cst_44 = arith.constant 9.99999974E-6 : f32
    %94 = vector.broadcast %cst_44 : f32 to vector<1x128xf32>
    %95 = arith.addf %93, %94 : vector<1x128xf32>
    %96 = math.rsqrt %95 : vector<1x128xf32>
    %97 = arith.mulf %96, %3 : vector<1x128xf32>
    %98 = arith.mulf %88, %97 : vector<1x128xf32>
    %99 = arith.subf %4, %98 : vector<1x128xf32>
    %100 = vector.broadcast %97 : vector<1x128xf32> to vector<32x128xf32>
    %101 = arith.mulf %71, %100 : vector<32x128xf32>
    %102 = vector.broadcast %99 : vector<1x128xf32> to vector<32x128xf32>
    %103 = arith.addf %101, %102 : vector<32x128xf32>
    %104 = arith.addf %103, %59 : vector<32x128xf32>
    %cst_45 = arith.constant 0.000000e+00 : f32
    %105 = vector.broadcast %cst_45 : f32 to vector<32x128xf32>
    %106 = arith.maximumf %104, %105 : vector<32x128xf32>
    %c0_46 = arith.constant 0 : index
    %c0_47 = arith.constant 0 : index
    %107 = vector.load %arg5[%c0_46, %c0_47] : memref<32x128xf32, #tpu.memory_space<vmem>>, vector<32x128xf32>
    tpu.vector_store %arg5[%c0_46, %c0_47], %106 {strides = array<i32>} : memref<32x128xf32, #tpu.memory_space<vmem>>, vector<32x128xf32>,
    return
  }
  func.func @transform_0(%arg0: i32) -> (i32, i32) {
    %c0_i32 = arith.constant 0 : i32
    %c0_i32_0 = arith.constant 0 : i32
    %c0_i32_1 = arith.constant 0 : i32
    return %c0_i32, %c0_i32_0 : i32, i32
  }
  func.func @transform_1(%arg0: i32) -> (i32, i32) {
    %c0_i32 = arith.constant 0 : i32
    %c0_i32_0 = arith.constant 0 : i32
    %c0_i32_1 = arith.constant 0 : i32
    return %c0_i32, %c0_i32_0 : i32, i32
  }
  func.func @transform_2(%arg0: i32) -> (i32, i32) {
    %c0_i32 = arith.constant 0 : i32
    %c0_i32_0 = arith.constant 0 : i32
    %c0_i32_1 = arith.constant 0 : i32
    return %c0_i32, %c0_i32_0 : i32, i32
  }
  func.func @transform_3(%arg0: i32) -> (i32, i32) {
    %c0_i32 = arith.constant 0 : i32
    %c0_i32_0 = arith.constant 0 : i32
    %c0_i32_1 = arith.constant 0 : i32
    return %c0_i32, %c0_i32_0 : i32, i32
  }
  func.func @transform_4(%arg0: i32) -> (i32, i32) {
    %c0_i32 = arith.constant 0 : i32
    %c0_i32_0 = arith.constant 0 : i32
    %c0_i32_1 = arith.constant 0 : i32
    return %c0_i32, %c0_i32_0 : i32, i32
  }
}

</mosaic_0001>

<llo_original>
// kernel: resnet_identity_block_v2.1
$region0: #{resnet_identity_block_v2.1}
  #allocation0 [shape = 'u32[]', space=smem, size = 0x4, offset = 0x4, fixed_abs, tag = 'smem constant byte address 0x4 - core index']
  #allocation1 [shape = 'u32[144,128]{1,0:T(1,128)}', space=vmem, size = 0x12000, scoped, tag = 'internal scratch']
  #allocation2 [shape = 'f32[2,18,128]{2,1,0:T(8,128)}', space=vmem, size = 0x6000, scoped, tag = 'scratch operand']
  %s0 = inlined_call_operand.vmem [shape: bf16[32,128], index: 0, kind: input, shape index: {}]
  %s1 = inlined_call_operand.vmem [shape: bf16[384,256], index: 1, kind: input, shape index: {}]
  %s2 = inlined_call_operand.vmem [shape: bf16[384,128], index: 2, kind: input, shape index: {}]
  %s3 = inlined_call_operand.vmem [shape: f32[5,128], index: 3, kind: input, shape index: {}]
  %s4 = inlined_call_operand.vmem [shape: f32[32,128], index: 4, kind: output, shape index: {}]
  %s5 = sld [smem:[#allocation0]]
  $region26: #{resnet_identity_block_v2.1} parent=0
    _
  %s7 = ssub.s32 1, %s5
  %s8 = scalar_select 0, %s7, %s5
  // Predicated region
  $region2: #{resnet_identity_block_v2.1} parent=0 // pred_check
    _
  $region3: #{resnet_identity_block_v2.1} parent=0 // pred_check_branch
    %10 = sbr.rel (0) target = $region5
  $region4: #{resnet_identity_block_v2.1} parent=0 // pred_region
    _
  $region5: #{resnet_identity_block_v2.1} parent=0 // pred_fallthru
    _
  // Predicated region
  $region6: #{resnet_identity_block_v2.1} parent=0 // pred_check
    _
  $region7: #{resnet_identity_block_v2.1} parent=0 // pred_check_branch
    %12 = sbr.rel (0) target = $region9
  $region8: #{resnet_identity_block_v2.1} parent=0 // pred_region
    _
  $region9: #{resnet_identity_block_v2.1} parent=0 // pred_fallthru
    _
  // Predicated region
  $region10: #{resnet_identity_block_v2.1} parent=0 // pred_check
    _
  $region11: #{resnet_identity_block_v2.1} parent=0 // pred_check_branch
    %14 = sbr.rel (0) target = $region13
  $region12: #{resnet_identity_block_v2.1} parent=0 // pred_region
    _
  $region13: #{resnet_identity_block_v2.1} parent=0 // pred_fallthru
    _
  // Predicated region
  $region14: #{resnet_identity_block_v2.1} parent=0 // pred_check
    _
  $region15: #{resnet_identity_block_v2.1} parent=0 // pred_check_branch
    %16 = sbr.rel (0) target = $region17
  $region16: #{resnet_identity_block_v2.1} parent=0 // pred_region
    _
  $region17: #{resnet_identity_block_v2.1} parent=0 // pred_fallthru
    _
  %v18 = vld [vmem:[%s3] sm:$0x1f]
  %19 = vst [vmem:[#allocation2] sm:$0x1] 0.0
  %20 = vst [vmem:[#allocation2 + $0x18] sm:$0x1] 0.0
  %21 = vst [vmem:[#allocation2 + $0x11] sm:$0x1] 0.0
  %22 = vst [vmem:[#allocation2 + $0x29] sm:$0x1] 0.0
  %v23 = vld [vmem:[%s0] sm:$0xf]
  %v24 = vld [vmem:[%s0 + $0x4] sm:$0xf]
  %v25 = vld [vmem:[%s0 + $0x8] sm:$0xf]
  %v26 = vld [vmem:[%s0 + $0xc] sm:$0xf]
  %v27 = vunpack.c.l.bf16 %v23
  %v28 = vunpack.c.l.bf16 %v24
  %v29 = vunpack.c.l.bf16 %v25
  %v30 = vunpack.c.l.bf16 %v26
  %31 = vst [vmem:[#allocation2 + $0x1] sm:$0xff] %v27
  %32 = vst [vmem:[#allocation2 + $0x9] sm:$0xff] %v28
  %33 = vst [vmem:[#allocation2 + $0x19] sm:$0xff] %v29
  %34 = vst [vmem:[#allocation2 + $0x21] sm:$0xff] %v30
  %v35 = vld [vmem:[#allocation2] sm:$0xff]
  %v36 = vld [vmem:[#allocation2 + $0x8] sm:$0xff]
  %v37 = vld [vmem:[#allocation2 + $0x18] sm:$0xff]
  %v38 = vld [vmem:[#allocation2 + $0x20] sm:$0xff]
  %v39 = vpack.c.bf16 %v36, %v35
  %v40 = vpack.c.bf16 %v38, %v37
  %v41 = vld [vmem:[#allocation2 + $0x2] sm:$0xff]
  %v42 = vld [vmem:[#allocation2 + $0xa] sm:$0xff]
  %v43 = vld [vmem:[#allocation2 + $0x1a] sm:$0xff]
  %v44 = vld [vmem:[#allocation2 + $0x22] sm:$0xff]
  %v45 = vpack.c.bf16 %v42, %v41
  %v46 = vpack.c.bf16 %v44, %v43
  %v51 = vunpack.c.l.b16 %v23
  %v52 = vunpack.c.l.b16 %v24
  %v53 = vunpack.c.l.b16 %v25
  %v54 = vunpack.c.l.b16 %v26
  %v55 = vpack.c.b16 %v52, %v51
  %v56 = vpack.c.b16 %v54, %v53
  %v59 = vld [vmem:[%s1] sm:$0xff]
  %v60 = vld [vmem:[%s1 + $0x8] sm:$0xff]
  %v61 = vld [vmem:[%s1 + $0x10] sm:$0xff]
  %v62 = vld [vmem:[%s1 + $0x18] sm:$0xff]
  %v63 = vld [vmem:[%s1 + $0x20] sm:$0xff]
  %v64 = vld [vmem:[%s1 + $0x28] sm:$0xff]
  %v65 = vld [vmem:[%s1 + $0x30] sm:$0xff]
  %v66 = vld [vmem:[%s1 + $0x38] sm:$0xff]
  %v67 = vld [vmem:[%s1 + $0x40] sm:$0xff]
  %v68 = vld [vmem:[%s1 + $0x48] sm:$0xff]
  %v69 = vld [vmem:[%s1 + $0x50] sm:$0xff]
  %v70 = vld [vmem:[%s1 + $0x58] sm:$0xff]
  %v71 = vld [vmem:[%s1 + $0x60] sm:$0xff]
  %v72 = vld [vmem:[%s1 + $0x68] sm:$0xff]
  %v73 = vld [vmem:[%s1 + $0x70] sm:$0xff]
  %v74 = vld [vmem:[%s1 + $0x78] sm:$0xff]
  %v75 = vld [vmem:[%s1 + $0x80] sm:$0xff]
  %v76 = vld [vmem:[%s1 + $0x88] sm:$0xff]
  %v77 = vld [vmem:[%s1 + $0x90] sm:$0xff]
  %v78 = vld [vmem:[%s1 + $0x98] sm:$0xff]
  %v79 = vld [vmem:[%s1 + $0xa0] sm:$0xff]
  %v80 = vld [vmem:[%s1 + $0xa8] sm:$0xff]
  %v81 = vld [vmem:[%s1 + $0xb0] sm:$0xff]
  %v82 = vld [vmem:[%s1 + $0xb8] sm:$0xff]
  %v83 = vld [vmem:[%s1 + $0xc0] sm:$0xff]
  %v84 = vld [vmem:[%s1 + $0xc8] sm:$0xff]
  %v85 = vld [vmem:[%s1 + $0xd0] sm:$0xff]
  %v86 = vld [vmem:[%s1 + $0xd8] sm:$0xff]
  %v87 = vld [vmem:[%s1 + $0xe0] sm:$0xff]
  %v88 = vld [vmem:[%s1 + $0xe8] sm:$0xff]
  %v89 = vld [vmem:[%s1 + $0xf0] sm:$0xff]
  %v90 = vld [vmem:[%s1 + $0xf8] sm:$0xff]
  %v91 = vld [vmem:[%s1 + $0x100] sm:$0xff]
  %v92 = vld [vmem:[%s1 + $0x108] sm:$0xff]
  %v93 = vld [vmem:[%s1 + $0x110] sm:$0xff]
  %v94 = vld [vmem:[%s1 + $0x118] sm:$0xff]
  %v95 = vld [vmem:[%s1 + $0x120] sm:$0xff]
  %v96 = vld [vmem:[%s1 + $0x128] sm:$0xff]
  %v97 = vld [vmem:[%s1 + $0x130] sm:$0xff]
  %v98 = vld [vmem:[%s1 + $0x138] sm:$0xff]
  %v99 = vld [vmem:[%s1 + $0x140] sm:$0xff]
  %v100 = vld [vmem:[%s1 + $0x148] sm:$0xff]
  %v101 = vld [vmem:[%s1 + $0x150] sm:$0xff]
  %v102 = vld [vmem:[%s1 + $0x158] sm:$0xff]
  %v103 = vld [vmem:[%s1 + $0x160] sm:$0xff]
  %v104 = vld [vmem:[%s1 + $0x168] sm:$0xff]
  %v105 = vld [vmem:[%s1 + $0x170] sm:$0xff]
  %v106 = vld [vmem:[%s1 + $0x178] sm:$0xff]
  %v155 = vunpack.c.l.b16 %v59
  %v156 = vunpack.c.h.b16 %v59
  %v157 = vunpack.c.l.b16 %v60
  %v158 = vunpack.c.h.b16 %v60
  %v159 = vunpack.c.l.b16 %v61
  %v160 = vunpack.c.h.b16 %v61
  %v161 = vunpack.c.l.b16 %v62
  %v162 = vunpack.c.h.b16 %v62
  %v163 = vunpack.c.l.b16 %v63
  %v164 = vunpack.c.h.b16 %v63
  %v165 = vunpack.c.l.b16 %v64
  %v166 = vunpack.c.h.b16 %v64
  %v167 = vunpack.c.l.b16 %v65
  %v168 = vunpack.c.h.b16 %v65
  %v169 = vunpack.c.l.b16 %v66
  %v170 = vunpack.c.h.b16 %v66
  %v171 = vunpack.c.l.b16 %v67
  %v172 = vunpack.c.h.b16 %v67
  %v173 = vunpack.c.l.b16 %v68
  %v174 = vunpack.c.h.b16 %v68
  %v175 = vunpack.c.l.b16 %v69
  %v176 = vunpack.c.h.b16 %v69
  %v177 = vunpack.c.l.b16 %v70
  %v178 = vunpack.c.h.b16 %v70
  %v179 = vunpack.c.l.b16 %v71
  %v180 = vunpack.c.h.b16 %v71
  %v181 = vunpack.c.l.b16 %v72
  %v182 = vunpack.c.h.b16 %v72
  %v183 = vunpack.c.l.b16 %v73
  %v184 = vunpack.c.h.b16 %v73
  %v185 = vunpack.c.l.b16 %v74
  %v186 = vunpack.c.h.b16 %v74
  %v187 = vunpack.c.l.b16 %v75
  %v188 = vunpack.c.h.b16 %v75
  %v189 = vunpack.c.l.b16 %v76
  %v190 = vunpack.c.h.b16 %v76
  %v191 = vunpack.c.l.b16 %v77
  %v192 = vunpack.c.h.b16 %v77
  %v193 = vunpack.c.l.b16 %v78
  %v194 = vunpack.c.h.b16 %v78
  %v195 = vunpack.c.l.b16 %v79
  %v196 = vunpack.c.h.b16 %v79
  %v197 = vunpack.c.l.b16 %v80
  %v198 = vunpack.c.h.b16 %v80
  %v199 = vunpack.c.l.b16 %v81
  %v200 = vunpack.c.h.b16 %v81
  %v201 = vunpack.c.l.b16 %v82
  %v202 = vunpack.c.h.b16 %v82
  %v203 = vunpack.c.l.b16 %v83
  %v204 = vunpack.c.h.b16 %v83
  %v205 = vunpack.c.l.b16 %v84
  %v206 = vunpack.c.h.b16 %v84
  %v207 = vunpack.c.l.b16 %v85
  %v208 = vunpack.c.h.b16 %v85
  %v209 = vunpack.c.l.b16 %v86
  %v210 = vunpack.c.h.b16 %v86
  %v211 = vunpack.c.l.b16 %v87
  %v212 = vunpack.c.h.b16 %v87
  %v213 = vunpack.c.l.b16 %v88
  %v214 = vunpack.c.h.b16 %v88
  %v215 = vunpack.c.l.b16 %v89
  %v216 = vunpack.c.h.b16 %v89
  %v217 = vunpack.c.l.b16 %v90
  %v218 = vunpack.c.h.b16 %v90
  %v219 = vunpack.c.l.b16 %v91
  %v220 = vunpack.c.h.b16 %v91
  %v221 = vunpack.c.l.b16 %v92
  %v222 = vunpack.c.h.b16 %v92
  %v223 = vunpack.c.l.b16 %v93
  %v224 = vunpack.c.h.b16 %v93
  %v225 = vunpack.c.l.b16 %v94
  %v226 = vunpack.c.h.b16 %v94
  %v227 = vunpack.c.l.b16 %v95
  %v228 = vunpack.c.h.b16 %v95
  %v229 = vunpack.c.l.b16 %v96
  %v230 = vunpack.c.h.b16 %v96
  %v231 = vunpack.c.l.b16 %v97
  %v232 = vunpack.c.h.b16 %v97
  %v233 = vunpack.c.l.b16 %v98
  %v234 = vunpack.c.h.b16 %v98
  %v235 = vunpack.c.l.b16 %v99
  %v236 = vunpack.c.h.b16 %v99
  %v237 = vunpack.c.l.b16 %v100
  %v238 = vunpack.c.h.b16 %v100
  %v239 = vunpack.c.l.b16 %v101
  %v240 = vunpack.c.h.b16 %v101
  %v241 = vunpack.c.l.b16 %v102
  %v242 = vunpack.c.h.b16 %v102
  %v243 = vunpack.c.l.b16 %v103
  %v244 = vunpack.c.h.b16 %v103
  %v245 = vunpack.c.l.b16 %v104
  %v246 = vunpack.c.h.b16 %v104
  %v247 = vunpack.c.l.b16 %v105
  %v248 = vunpack.c.h.b16 %v105
  %v249 = vunpack.c.l.b16 %v106
  %v250 = vunpack.c.h.b16 %v106
  %v251 = vpack.c.b16 %v157, %v155
  %v252 = vpack.c.b16 %v158, %v156
  %v253 = vpack.c.b16 %v161, %v159
  %v254 = vpack.c.b16 %v162, %v160
  %v255 = vpack.c.b16 %v165, %v163
  %v256 = vpack.c.b16 %v166, %v164
  %v257 = vpack.c.b16 %v169, %v167
  %v258 = vpack.c.b16 %v170, %v168
  %v259 = vpack.c.b16 %v173, %v171
  %v260 = vpack.c.b16 %v174, %v172
  %v261 = vpack.c.b16 %v177, %v175
  %v262 = vpack.c.b16 %v178, %v176
  %v263 = vpack.c.b16 %v181, %v179
  %v264 = vpack.c.b16 %v182, %v180
  %v265 = vpack.c.b16 %v185, %v183
  %v266 = vpack.c.b16 %v186, %v184
  %v267 = vpack.c.b16 %v189, %v187
  %v268 = vpack.c.b16 %v190, %v188
  %v269 = vpack.c.b16 %v193, %v191
  %v270 = vpack.c.b16 %v194, %v192
  %v271 = vpack.c.b16 %v197, %v195
  %v272 = vpack.c.b16 %v198, %v196
  %v273 = vpack.c.b16 %v201, %v199
  %v274 = vpack.c.b16 %v202, %v200
  %v275 = vpack.c.b16 %v205, %v203
  %v276 = vpack.c.b16 %v206, %v204
  %v277 = vpack.c.b16 %v209, %v207
  %v278 = vpack.c.b16 %v210, %v208
  %v279 = vpack.c.b16 %v213, %v211
  %v280 = vpack.c.b16 %v214, %v212
  %v281 = vpack.c.b16 %v217, %v215
  %v282 = vpack.c.b16 %v218, %v216
  %v283 = vpack.c.b16 %v221, %v219
  %v284 = vpack.c.b16 %v222, %v220
  %v285 = vpack.c.b16 %v225, %v223
  %v286 = vpack.c.b16 %v226, %v224
  %v287 = vpack.c.b16 %v229, %v227
  %v288 = vpack.c.b16 %v230, %v228
  %v289 = vpack.c.b16 %v233, %v231
  %v290 = vpack.c.b16 %v234, %v232
  %v291 = vpack.c.b16 %v237, %v235
  %v292 = vpack.c.b16 %v238, %v236
  %v293 = vpack.c.b16 %v241, %v239
  %v294 = vpack.c.b16 %v242, %v240
  %v295 = vpack.c.b16 %v245, %v243
  %v296 = vpack.c.b16 %v246, %v244
  %v297 = vpack.c.b16 %v249, %v247
  %v298 = vpack.c.b16 %v250, %v248
  %347 = vmatprep.subr.bf16.mxu0 %v252
  %348 = vmatpush1.bf16.msra.mxu0 %v251
  %349 = vmatprep.subr.bf16.mxu0 %v254
  %350 = vmatpush1.bf16.msra.mxu0 %v253
  %351 = vmatprep.subr.bf16.mxu0 %v256
  %352 = vmatpush1.bf16.msra.mxu0 %v255
  %353 = vmatprep.subr.bf16.mxu0 %v258
  %354 = vmatpush1.bf16.msra.mxu0 %v257
  %355 = vmatprep.subr.bf16.mxu0 %v260
  %356 = vmatpush1.bf16.msra.mxu0 %v259
  %357 = vmatprep.subr.bf16.mxu0 %v262
  %358 = vmatpush1.bf16.msra.mxu0 %v261
  %359 = vmatprep.subr.bf16.mxu0 %v264
  %360 = vmatpush1.bf16.msra.mxu0 %v263
  %361 = vmatprep.subr.bf16.mxu0 %v266
  %362 = vmatpush1.bf16.msra.mxu0 %v265
  %363 = vmatprep.subr.bf16.mxu0 %v268
  %364 = vmatpush1.bf16.msra.mxu0 %v267
  %365 = vmatprep.subr.bf16.mxu0 %v270
  %366 = vmatpush1.bf16.msra.mxu0 %v269
  %367 = vmatprep.subr.bf16.mxu0 %v272
  %368 = vmatpush1.bf16.msra.mxu0 %v271
  %369 = vmatprep.subr.bf16.mxu0 %v274
  %370 = vmatpush1.bf16.msra.mxu0 %v273
  %371 = vmatprep.subr.bf16.mxu0 %v276
  %372 = vmatpush1.bf16.msra.mxu0 %v275
  %373 = vmatprep.subr.bf16.mxu0 %v278
  %374 = vmatpush1.bf16.msra.mxu0 %v277
  %375 = vmatprep.subr.bf16.mxu0 %v280
  %376 = vmatpush1.bf16.msra.mxu0 %v279
  %377 = vmatprep.subr.bf16.mxu0 %v282
  %378 = vmatpush1.bf16.msra.mxu0 %v281
  %379 = vmatprep.mubr.bf16.mxu0 %v55
  %380 = vmatmul.mubr.bf16.gmra.mrb[0].mxu0 %v39
  %v381 = vpop.f32.mrb[0].mxu0
  %v382 = vadd.f32 0.0, %v381
  %v383 = vpop.f32.mrb[0].mxu0
  %v384 = vadd.f32 0.0, %v383
  %v385 = vpop.f32.mrb[0].mxu0
  %v386 = vadd.f32 0.0, %v385
  %v387 = vpop.f32.mrb[0].mxu0
  %v388 = vadd.f32 0.0, %v387
  %389 = vmatprep.mubr.bf16.mxu0 %v56
  %390 = vmatmul.mubr.bf16.gmra.mrb[0].mxu0 %v40
  %v391 = vpop.f32.mrb[0].mxu0
  %v392 = vadd.f32 0.0, %v391
  %v393 = vpop.f32.mrb[0].mxu0
  %v394 = vadd.f32 0.0, %v393
  %v395 = vpop.f32.mrb[0].mxu0
  %v396 = vadd.f32 0.0, %v395
  %v397 = vpop.f32.mrb[0].mxu0
  %v398 = vadd.f32 0.0, %v397
  %399 = vdwg.mxu0
  %400 = vmatprep.subr.bf16.mxu0 %v284
  %401 = vmatpush1.bf16.msra.mxu0 %v283
  %402 = vmatprep.subr.bf16.mxu0 %v286
  %403 = vmatpush1.bf16.msra.mxu0 %v285
  %404 = vmatprep.subr.bf16.mxu0 %v288
  %405 = vmatpush1.bf16.msra.mxu0 %v287
  %406 = vmatprep.subr.bf16.mxu0 %v290
  %407 = vmatpush1.bf16.msra.mxu0 %v289
  %408 = vmatprep.subr.bf16.mxu0 %v292
  %409 = vmatpush1.bf16.msra.mxu0 %v291
  %410 = vmatprep.subr.bf16.mxu0 %v294
  %411 = vmatpush1.bf16.msra.mxu0 %v293
  %412 = vmatprep.subr.bf16.mxu0 %v296
  %413 = vmatpush1.bf16.msra.mxu0 %v295
  %414 = vmatprep.subr.bf16.mxu0 %v298
  %415 = vmatpush1.bf16.msra.mxu0 %v297
  %416 = vmatprep.subr.bf16.mxu0 0
  %417 = vmatpush1.bf16.msra.mxu0 0
  %418 = vmatprep.subr.bf16.mxu0 0
  %419 = vmatpush1.bf16.msra.mxu0 0
  %420 = vmatprep.subr.bf16.mxu0 0
  %421 = vmatpush1.bf16.msra.mxu0 0
  %422 = vmatprep.subr.bf16.mxu0 0
  %423 = vmatpush1.bf16.msra.mxu0 0
  %424 = vmatprep.subr.bf16.mxu0 0
  %425 = vmatpush1.bf16.msra.mxu0 0
  %426 = vmatprep.subr.bf16.mxu0 0
  %427 = vmatpush1.bf16.msra.mxu0 0
  %428 = vmatprep.subr.bf16.mxu0 0
  %429 = vmatpush1.bf16.msra.mxu0 0
  %430 = vmatprep.subr.bf16.mxu0 0
  %431 = vmatpush1.bf16.msra.mxu0 0
  %432 = vmatprep.mubr.bf16.mxu0 0
  %433 = vmatmul.mubr.bf16.gmra.mrb[0].mxu0 %v45
  %v434 = vpop.f32.mrb[0].mxu0
  %v435 = vadd.f32 %v382, %v434
  %v436 = vpop.f32.mrb[0].mxu0
  %v437 = vadd.f32 %v384, %v436
  %v438 = vpop.f32.mrb[0].mxu0
  %v439 = vadd.f32 %v386, %v438
  %v440 = vpop.f32.mrb[0].mxu0
  %v441 = vadd.f32 %v388, %v440
  %442 = vmatprep.mubr.bf16.mxu0 0
  %443 = vmatmul.mubr.bf16.gmra.mrb[0].mxu0 %v46
  %v444 = vpop.f32.mrb[0].mxu0
  %v445 = vadd.f32 %v392, %v444
  %v446 = vpop.f32.mrb[0].mxu0
  %v447 = vadd.f32 %v394, %v446
  %v448 = vpop.f32.mrb[0].mxu0
  %v449 = vadd.f32 %v396, %v448
  %v450 = vpop.f32.mrb[0].mxu0
  %v451 = vadd.f32 %v398, %v450
  %452 = vdwg.mxu0
  %v453 = vadd.f32 %v435, %v439
  %v454 = vadd.f32 %v453, %v445
  %v455 = vadd.f32 %v454, %v449
  %v456 = vrot.slane %v455, 4
  %v457 = vadd.f32 %v455, %v456
  %v458 = vrot.slane %v457, 2
  %v459 = vadd.f32 %v457, %v458
  %v460 = vrot.slane %v459, 1
  %v461 = vadd.f32 %v459, %v460
  %v462 = vmul.f32 %v435, %v435
  %v463 = vmul.f32 %v439, %v439
  %v464 = vmul.f32 %v445, %v445
  %v465 = vmul.f32 %v449, %v449
  %v466 = vadd.f32 %v462, %v463
  %v467 = vadd.f32 %v466, %v464
  %v468 = vadd.f32 %v467, %v465
  %v469 = vrot.slane %v468, 4
  %v470 = vadd.f32 %v468, %v469
  %v471 = vrot.slane %v470, 2
  %v472 = vadd.f32 %v470, %v471
  %v473 = vrot.slane %v472, 1
  %v474 = vadd.f32 %v472, %v473
  %vm475 = vcmask 1040384
  %v476 = vsel %vm475, %v461, %v474
  %477 = vrot.lane.b32.xlu0 %v476, 8
  %v478 = vpop.permute.xlu0 %477
  %v479 = vadd.f32 %v476, %v478
  %480 = vrot.lane.b32.xlu0 %v479, 16
  %v481 = vpop.permute.xlu0 %480
  %v482 = vadd.f32 %v479, %v481
  %483 = vrot.lane.b32.xlu0 %v482, 32
  %v484 = vpop.permute.xlu0 %483
  %v485 = vadd.f32 %v482, %v484
  %486 = vrot.lane.b32.xlu0 %v485, 64
  %v487 = vpop.permute.xlu0 %486
  %v488 = vadd.f32 %v485, %v487
  %v489 = vmul.f32 %v488, 0.001953125
  %v490 = vmul.f32 %v489, %v489
  %v492 = vrot.slane %v490, 7
  %v494 = vsub.f32 %v489, %v492
  %v495 = vadd.f32 %v494, 1e-05
  %v496 = vrsqrt.pop %v495
  %v498 = vrot.slane %v18, 7
  %v500 = vmul.f32 %v496, %v498
  %v502 = vrot.slane %v500, 1
  %v504 = vmul.f32 %v489, %v502
  %v506 = vrot.slane %v504, 7
  %v508 = vsub.f32 %v18, %v506
  %v509 = vlaneseq
  %v510 = vshrl.u32 %v509, 7
  %v511 = vsub.s32 1, %v510
  %v512 = vrot.slane %v500, %v511
  %v513 = vmul.f32 %v435, %v512
  %v514 = vmul.f32 %v439, %v512
  %v515 = vmul.f32 %v445, %v512
  %v516 = vmul.f32 %v449, %v512
  %v517 = vlaneseq
  %v518 = vshrl.u32 %v517, 7
  %v519 = vsub.s32 1, %v518
  %v520 = vrot.slane %v508, %v519
  %v521 = vadd.f32 %v513, %v520
  %v522 = vadd.f32 %v514, %v520
  %v523 = vadd.f32 %v515, %v520
  %v524 = vadd.f32 %v516, %v520
  %v525 = vmax.f32 %v521, 0.0
  %v526 = vmax.f32 %v522, 0.0
  %v527 = vmax.f32 %v523, 0.0
  %v528 = vmax.f32 %v524, 0.0
  %v529 = vlaneseq
  %v530 = vshrl.u32 %v529, 7
  %v531 = vsub.s32 4, %v530
  %v532 = vrot.slane %v18, %v531
  %v533 = vadd.f32 %v437, %v532
  %v534 = vadd.f32 %v441, %v532
  %v535 = vadd.f32 %v447, %v532
  %v536 = vadd.f32 %v451, %v532
  %v537 = vpack.c.bf16 %v526, %v525
  %v538 = vpack.c.bf16 %v528, %v527
  %539 = vst [vmem:[#allocation2 + $0x1] sm:$0xff] %v525
  %540 = vst [vmem:[#allocation2 + $0x9] sm:$0xff] %v526
  %541 = vst [vmem:[#allocation2 + $0x19] sm:$0xff] %v527
  %542 = vst [vmem:[#allocation2 + $0x21] sm:$0xff] %v528
  %v543 = vld [vmem:[#allocation2] sm:$0xff]
  %v544 = vld [vmem:[#allocation2 + $0x8] sm:$0xff]
  %v545 = vld [vmem:[#allocation2 + $0x18] sm:$0xff]
  %v546 = vld [vmem:[#allocation2 + $0x20] sm:$0xff]
  %v547 = vpack.c.bf16 %v544, %v543
  %v548 = vpack.c.bf16 %v546, %v545
  %v549 = vld [vmem:[#allocation2 + $0x2] sm:$0xff]
  %v550 = vld [vmem:[#allocation2 + $0xa] sm:$0xff]
  %v551 = vld [vmem:[#allocation2 + $0x1a] sm:$0xff]
  %v552 = vld [vmem:[#allocation2 + $0x22] sm:$0xff]
  %v553 = vpack.c.bf16 %v550, %v549
  %v554 = vpack.c.bf16 %v552, %v551
  %v555 = vld [vmem:[%s2] sm:$0xf]
  %v556 = vld [vmem:[%s2 + $0x4] sm:$0xf]
  %v557 = vld [vmem:[%s2 + $0x8] sm:$0xf]
  %v558 = vld [vmem:[%s2 + $0xc] sm:$0xf]
  %v559 = vld [vmem:[%s2 + $0x10] sm:$0xf]
  %v560 = vld [vmem:[%s2 + $0x14] sm:$0xf]
  %v561 = vld [vmem:[%s2 + $0x18] sm:$0xf]
  %v562 = vld [vmem:[%s2 + $0x1c] sm:$0xf]
  %v563 = vld [vmem:[%s2 + $0x20] sm:$0xf]
  %v564 = vld [vmem:[%s2 + $0x24] sm:$0xf]
  %v565 = vld [vmem:[%s2 + $0x28] sm:$0xf]
  %v566 = vld [vmem:[%s2 + $0x2c] sm:$0xf]
  %v567 = vld [vmem:[%s2 + $0x30] sm:$0xf]
  %v568 = vld [vmem:[%s2 + $0x34] sm:$0xf]
  %v569 = vld [vmem:[%s2 + $0x38] sm:$0xf]
  %v570 = vld [vmem:[%s2 + $0x3c] sm:$0xf]
  %v571 = vld [vmem:[%s2 + $0x40] sm:$0xf]
  %v572 = vld [vmem:[%s2 + $0x44] sm:$0xf]
  %v573 = vld [vmem:[%s2 + $0x48] sm:$0xf]
  %v574 = vld [vmem:[%s2 + $0x4c] sm:$0xf]
  %v575 = vld [vmem:[%s2 + $0x50] sm:$0xf]
  %v576 = vld [vmem:[%s2 + $0x54] sm:$0xf]
  %v577 = vld [vmem:[%s2 + $0x58] sm:$0xf]
  %v578 = vld [vmem:[%s2 + $0x5c] sm:$0xf]
  %v579 = vld [vmem:[%s2 + $0x60] sm:$0xf]
  %v580 = vld [vmem:[%s2 + $0x64] sm:$0xf]
  %v581 = vld [vmem:[%s2 + $0x68] sm:$0xf]
  %v582 = vld [vmem:[%s2 + $0x6c] sm:$0xf]
  %v583 = vld [vmem:[%s2 + $0x70] sm:$0xf]
  %v584 = vld [vmem:[%s2 + $0x74] sm:$0xf]
  %v585 = vld [vmem:[%s2 + $0x78] sm:$0xf]
  %v586 = vld [vmem:[%s2 + $0x7c] sm:$0xf]
  %v587 = vld [vmem:[%s2 + $0x80] sm:$0xf]
  %v588 = vld [vmem:[%s2 + $0x84] sm:$0xf]
  %v589 = vld [vmem:[%s2 + $0x88] sm:$0xf]
  %v590 = vld [vmem:[%s2 + $0x8c] sm:$0xf]
  %v591 = vld [vmem:[%s2 + $0x90] sm:$0xf]
  %v592 = vld [vmem:[%s2 + $0x94] sm:$0xf]
  %v593 = vld [vmem:[%s2 + $0x98] sm:$0xf]
  %v594 = vld [vmem:[%s2 + $0x9c] sm:$0xf]
  %v595 = vld [vmem:[%s2 + $0xa0] sm:$0xf]
  %v596 = vld [vmem:[%s2 + $0xa4] sm:$0xf]
  %v597 = vld [vmem:[%s2 + $0xa8] sm:$0xf]
  %v598 = vld [vmem:[%s2 + $0xac] sm:$0xf]
  %v599 = vld [vmem:[%s2 + $0xb0] sm:$0xf]
  %v600 = vld [vmem:[%s2 + $0xb4] sm:$0xf]
  %v601 = vld [vmem:[%s2 + $0xb8] sm:$0xf]
  %v602 = vld [vmem:[%s2 + $0xbc] sm:$0xf]
  %v651 = vunpack.c.l.b16 %v555
  %v652 = vunpack.c.l.b16 %v556
  %v653 = vunpack.c.l.b16 %v557
  %v654 = vunpack.c.l.b16 %v558
  %v655 = vunpack.c.l.b16 %v559
  %v656 = vunpack.c.l.b16 %v560
  %v657 = vunpack.c.l.b16 %v561
  %v658 = vunpack.c.l.b16 %v562
  %v659 = vunpack.c.l.b16 %v563
  %v660 = vunpack.c.l.b16 %v564
  %v661 = vunpack.c.l.b16 %v565
  %v662 = vunpack.c.l.b16 %v566
  %v663 = vunpack.c.l.b16 %v567
  %v664 = vunpack.c.l.b16 %v568
  %v665 = vunpack.c.l.b16 %v569
  %v666 = vunpack.c.l.b16 %v570
  %v667 = vunpack.c.l.b16 %v571
  %v668 = vunpack.c.l.b16 %v572
  %v669 = vunpack.c.l.b16 %v573
  %v670 = vunpack.c.l.b16 %v574
  %v671 = vunpack.c.l.b16 %v575
  %v672 = vunpack.c.l.b16 %v576
  %v673 = vunpack.c.l.b16 %v577
  %v674 = vunpack.c.l.b16 %v578
  %v675 = vunpack.c.l.b16 %v579
  %v676 = vunpack.c.l.b16 %v580
  %v677 = vunpack.c.l.b16 %v581
  %v678 = vunpack.c.l.b16 %v582
  %v679 = vunpack.c.l.b16 %v583
  %v680 = vunpack.c.l.b16 %v584
  %v681 = vunpack.c.l.b16 %v585
  %v682 = vunpack.c.l.b16 %v586
  %v683 = vunpack.c.l.b16 %v587
  %v684 = vunpack.c.l.b16 %v588
  %v685 = vunpack.c.l.b16 %v589
  %v686 = vunpack.c.l.b16 %v590
  %v687 = vunpack.c.l.b16 %v591
  %v688 = vunpack.c.l.b16 %v592
  %v689 = vunpack.c.l.b16 %v593
  %v690 = vunpack.c.l.b16 %v594
  %v691 = vunpack.c.l.b16 %v595
  %v692 = vunpack.c.l.b16 %v596
  %v693 = vunpack.c.l.b16 %v597
  %v694 = vunpack.c.l.b16 %v598
  %v695 = vunpack.c.l.b16 %v599
  %v696 = vunpack.c.l.b16 %v600
  %v697 = vunpack.c.l.b16 %v601
  %v698 = vunpack.c.l.b16 %v602
  %v699 = vpack.c.b16 %v652, %v651
  %v700 = vpack.c.b16 %v654, %v653
  %v701 = vpack.c.b16 %v656, %v655
  %v702 = vpack.c.b16 %v658, %v657
  %v703 = vpack.c.b16 %v660, %v659
  %v704 = vpack.c.b16 %v662, %v661
  %v705 = vpack.c.b16 %v664, %v663
  %v706 = vpack.c.b16 %v666, %v665
  %v707 = vpack.c.b16 %v668, %v667
  %v708 = vpack.c.b16 %v670, %v669
  %v709 = vpack.c.b16 %v672, %v671
  %v710 = vpack.c.b16 %v674, %v673
  %v711 = vpack.c.b16 %v676, %v675
  %v712 = vpack.c.b16 %v678, %v677
  %v713 = vpack.c.b16 %v680, %v679
  %v714 = vpack.c.b16 %v682, %v681
  %v715 = vpack.c.b16 %v684, %v683
  %v716 = vpack.c.b16 %v686, %v685
  %v717 = vpack.c.b16 %v688, %v687
  %v718 = vpack.c.b16 %v690, %v689
  %v719 = vpack.c.b16 %v692, %v691
  %v720 = vpack.c.b16 %v694, %v693
  %v721 = vpack.c.b16 %v696, %v695
  %v722 = vpack.c.b16 %v698, %v697
  %747 = vmatprep.subr.bf16.mxu0 0
  %748 = vmatpush1.bf16.msra.mxu0 %v699
  %749 = vmatprep.subr.bf16.mxu0 0
  %750 = vmatpush1.bf16.msra.mxu0 %v700
  %751 = vmatprep.subr.bf16.mxu0 0
  %752 = vmatpush1.bf16.msra.mxu0 %v701
  %753 = vmatprep.subr.bf16.mxu0 0
  %754 = vmatpush1.bf16.msra.mxu0 %v702
  %755 = vmatprep.subr.bf16.mxu0 0
  %756 = vmatpush1.bf16.msra.mxu0 %v703
  %757 = vmatprep.subr.bf16.mxu0 0
  %758 = vmatpush1.bf16.msra.mxu0 %v704
  %759 = vmatprep.subr.bf16.mxu0 0
  %760 = vmatpush1.bf16.msra.mxu0 %v705
  %761 = vmatprep.subr.bf16.mxu0 0
  %762 = vmatpush1.bf16.msra.mxu0 %v706
  %763 = vmatprep.subr.bf16.mxu0 0
  %764 = vmatpush1.bf16.msra.mxu0 %v707
  %765 = vmatprep.subr.bf16.mxu0 0
  %766 = vmatpush1.bf16.msra.mxu0 %v708
  %767 = vmatprep.subr.bf16.mxu0 0
  %768 = vmatpush1.bf16.msra.mxu0 %v709
  %769 = vmatprep.subr.bf16.mxu0 0
  %770 = vmatpush1.bf16.msra.mxu0 %v710
  %771 = vmatprep.subr.bf16.mxu0 0
  %772 = vmatpush1.bf16.msra.mxu0 %v711
  %773 = vmatprep.subr.bf16.mxu0 0
  %774 = vmatpush1.bf16.msra.mxu0 %v712
  %775 = vmatprep.subr.bf16.mxu0 0
  %776 = vmatpush1.bf16.msra.mxu0 %v713
  %777 = vmatprep.subr.bf16.mxu0 0
  %778 = vmatpush1.bf16.msra.mxu0 %v714
  %779 = vmatprep.mubr.bf16.mxu0 %v537
  %780 = vmatmul.mubr.bf16.gmra.mrb[0].mxu0 %v547
  %v781 = vpop.f32.mrb[0].mxu0
  %v782 = vadd.f32 0.0, %v781
  %v783 = vpop.f32.mrb[0].mxu0
  %v784 = vpop.f32.mrb[0].mxu0
  %v785 = vadd.f32 0.0, %v784
  %v786 = vpop.f32.mrb[0].mxu0
  %787 = vmatprep.mubr.bf16.mxu0 %v538
  %788 = vmatmul.mubr.bf16.gmra.mrb[0].mxu0 %v548
  %v789 = vpop.f32.mrb[0].mxu0
  %v790 = vadd.f32 0.0, %v789
  %v791 = vpop.f32.mrb[0].mxu0
  %v792 = vpop.f32.mrb[0].mxu0
  %v793 = vadd.f32 0.0, %v792
  %v794 = vpop.f32.mrb[0].mxu0
  %795 = vdwg.mxu0
  %796 = vmatprep.subr.bf16.mxu0 0
  %797 = vmatpush1.bf16.msra.mxu0 %v715
  %798 = vmatprep.subr.bf16.mxu0 0
  %799 = vmatpush1.bf16.msra.mxu0 %v716
  %800 = vmatprep.subr.bf16.mxu0 0
  %801 = vmatpush1.bf16.msra.mxu0 %v717
  %802 = vmatprep.subr.bf16.mxu0 0
  %803 = vmatpush1.bf16.msra.mxu0 %v718
  %804 = vmatprep.subr.bf16.mxu0 0
  %805 = vmatpush1.bf16.msra.mxu0 %v719
  %806 = vmatprep.subr.bf16.mxu0 0
  %807 = vmatpush1.bf16.msra.mxu0 %v720
  %808 = vmatprep.subr.bf16.mxu0 0
  %809 = vmatpush1.bf16.msra.mxu0 %v721
  %810 = vmatprep.subr.bf16.mxu0 0
  %811 = vmatpush1.bf16.msra.mxu0 %v722
  %812 = vmatprep.subr.bf16.mxu0 0
  %813 = vmatpush1.bf16.msra.mxu0 0
  %814 = vmatprep.subr.bf16.mxu0 0
  %815 = vmatpush1.bf16.msra.mxu0 0
  %816 = vmatprep.subr.bf16.mxu0 0
  %817 = vmatpush1.bf16.msra.mxu0 0
  %818 = vmatprep.subr.bf16.mxu0 0
  %819 = vmatpush1.bf16.msra.mxu0 0
  %820 = vmatprep.subr.bf16.mxu0 0
  %821 = vmatpush1.bf16.msra.mxu0 0
  %822 = vmatprep.subr.bf16.mxu0 0
  %823 = vmatpush1.bf16.msra.mxu0 0
  %824 = vmatprep.subr.bf16.mxu0 0
  %825 = vmatpush1.bf16.msra.mxu0 0
  %826 = vmatprep.subr.bf16.mxu0 0
  %827 = vmatpush1.bf16.msra.mxu0 0
  %828 = vmatprep.mubr.bf16.mxu0 0
  %829 = vmatmul.mubr.bf16.gmra.mrb[0].mxu0 %v553
  %v830 = vpop.f32.mrb[0].mxu0
  %v831 = vadd.f32 %v782, %v830
  %v832 = vpop.f32.mrb[0].mxu0
  %v833 = vpop.f32.mrb[0].mxu0
  %v834 = vadd.f32 %v785, %v833
  %v835 = vpop.f32.mrb[0].mxu0
  %836 = vmatprep.mubr.bf16.mxu0 0
  %837 = vmatmul.mubr.bf16.gmra.mrb[0].mxu0 %v554
  %v838 = vpop.f32.mrb[0].mxu0
  %v839 = vadd.f32 %v790, %v838
  %v840 = vpop.f32.mrb[0].mxu0
  %v841 = vpop.f32.mrb[0].mxu0
  %v842 = vadd.f32 %v793, %v841
  %v843 = vpop.f32.mrb[0].mxu0
  %844 = vdwg.mxu0
  %v845 = vadd.f32 %v831, %v834
  %v846 = vadd.f32 %v845, %v839
  %v847 = vadd.f32 %v846, %v842
  %v848 = vrot.slane %v847, 4
  %v849 = vadd.f32 %v847, %v848
  %v850 = vrot.slane %v849, 2
  %v851 = vadd.f32 %v849, %v850
  %v852 = vrot.slane %v851, 1
  %v853 = vadd.f32 %v851, %v852
  %v854 = vmul.f32 %v831, %v831
  %v855 = vmul.f32 %v834, %v834
  %v856 = vmul.f32 %v839, %v839
  %v857 = vmul.f32 %v842, %v842
  %v858 = vadd.f32 %v854, %v855
  %v859 = vadd.f32 %v858, %v856
  %v860 = vadd.f32 %v859, %v857
  %v861 = vrot.slane %v860, 4
  %v862 = vadd.f32 %v860, %v861
  %v863 = vrot.slane %v862, 2
  %v864 = vadd.f32 %v862, %v863
  %v865 = vrot.slane %v864, 1
  %v866 = vadd.f32 %v864, %v865
  %v867 = vsel %vm475, %v853, %v866
  %868 = vrot.lane.b32.xlu0 %v867, 8
  %v869 = vpop.permute.xlu0 %868
  %v870 = vadd.f32 %v867, %v869
  %871 = vrot.lane.b32.xlu0 %v870, 16
  %v872 = vpop.permute.xlu0 %871
  %v873 = vadd.f32 %v870, %v872
  %874 = vrot.lane.b32.xlu0 %v873, 32
  %v875 = vpop.permute.xlu0 %874
  %v876 = vadd.f32 %v873, %v875
  %877 = vrot.lane.b32.xlu0 %v876, 64
  %v878 = vpop.permute.xlu0 %877
  %v879 = vadd.f32 %v876, %v878
  %v880 = vmul.f32 %v879, 0.001953125
  %v881 = vmul.f32 %v880, %v880
  %v883 = vrot.slane %v881, 7
  %v885 = vsub.f32 %v880, %v883
  %v886 = vadd.f32 %v885, 1e-05
  %v887 = vrsqrt.pop %v886
  %v888 = vrot.slane %v18, 1
  %v890 = vmul.f32 %v887, %v888
  %v892 = vrot.slane %v890, 1
  %v894 = vmul.f32 %v880, %v892
  %v896 = vrot.slane %v894, 5
  %v898 = vsub.f32 %v18, %v896
  %v899 = vlaneseq
  %v900 = vshrl.u32 %v899, 7
  %v901 = vsub.s32 1, %v900
  %v902 = vrot.slane %v890, %v901
  %v903 = vmul.f32 %v831, %v902
  %v904 = vmul.f32 %v834, %v902
  %v905 = vmul.f32 %v839, %v902
  %v906 = vmul.f32 %v842, %v902
  %v907 = vlaneseq
  %v908 = vshrl.u32 %v907, 7
  %v909 = vsub.s32 3, %v908
  %v910 = vrot.slane %v898, %v909
  %v911 = vadd.f32 %v903, %v910
  %v912 = vadd.f32 %v904, %v910
  %v913 = vadd.f32 %v905, %v910
  %v914 = vadd.f32 %v906, %v910
  %v915 = vadd.f32 %v911, %v533
  %v916 = vadd.f32 %v912, %v534
  %v917 = vadd.f32 %v913, %v535
  %v918 = vadd.f32 %v914, %v536
  %v919 = vmax.f32 %v915, 0.0
  %v920 = vmax.f32 %v916, 0.0
  %v921 = vmax.f32 %v917, 0.0
  %v922 = vmax.f32 %v918, 0.0
  %923 = vst [vmem:[%s4] sm:$0xff] %v919
  %924 = vst [vmem:[%s4 + $0x8] sm:$0xff] %v920
  %925 = vst [vmem:[%s4 + $0x10] sm:$0xff] %v921
  %926 = vst [vmem:[%s4 + $0x18] sm:$0xff] %v922
  // Predicated region
  $region18: #{resnet_identity_block_v2.1} parent=0 // pred_check
    _
  $region19: #{resnet_identity_block_v2.1} parent=0 // pred_check_branch
    %928 = sbr.rel (0) target = $region21
  $region20: #{resnet_identity_block_v2.1} parent=0 // pred_region
    _
  $region21: #{resnet_identity_block_v2.1} parent=0 // pred_fallthru
    _
  // Predicated region
  $region22: #{resnet_identity_block_v2.1} parent=0 // pred_check
    _
  $region23: #{resnet_identity_block_v2.1} parent=0 // pred_check_branch
    %930 = sbr.rel (0) target = $region25
  $region24: #{resnet_identity_block_v2.1} parent=0 // pred_region
    _
  $region25: #{resnet_identity_block_v2.1} parent=0 // pred_fallthru
    _

</llo_original>
